<compile_context>
chip_gen: v7x
topology: tpu7x:2x2x1
jax: 0.10.0
libtpu: 0.0.40
codegen_flags: <defaults>
</compile_context>

<pallas_src>
import jax
import jax.numpy as jnp
from jax.experimental import pallas as pl
from jax.experimental.pallas import tpu as pltpu


COMPUTE_DTYPE = jnp.bfloat16   # MXU operand dtype; accumulation stays float32


# ----------------------------- tiling / VMEM plan -----------------------------

def _vmem_capacity_bytes():
    try:
        return int(pltpu.get_tpu_info().vmem_capacity_bytes)
    except Exception:
        return 128 * 1024 * 1024


def _round8(v):
    return max(8, (v // 8) * 8)


def _plan_tiles(n, fin, hid, fout, ne):
    """Pick the row tile and scoped-VMEM limit from an explicit per-generation budget."""
    cap = _vmem_capacity_bytes()
    budget = int(0.70 * cap)              # headroom for compiler scratch / spills
    d1 = ne * hid                         # concatenated layer-1 output width

    def vmem_bytes(tn):
        # conservative: assume every BlockSpec is double-buffered (incl. constant blocks)
        k1 = (2 * tn * n * 2              # adjacency row strip (bf16)
              + 2 * n * fin * 2           # resident X (contraction operand)
              + 2 * tn * fin * 2          # X row tile (self term)
              + 2 * tn * 128 * 4          # 1/deg row tile (lane padded)
              + 2 * 2 * fin * d1 * 2      # fused [Wl1; Wr1] of all encoders
              + 2 * 8 * d1 * 4            # biases (sublane padded)
              + 2 * tn * d1 * 2)          # h1 output tile
        k2 = (2 * tn * n * 2              # adjacency row strip
              + 2 * n * d1 * 2            # resident h1 stack (all encoders)
              + 2 * tn * d1 * 2           # h1 row tile (self term)
              + 2 * tn * 128 * 4          # 1/deg row tile
              + 2 * tn * 128 * 4          # combine coefficients (lane padded)
              + 2 * ne * 2 * hid * fout * 2   # fused [Wl2; Wr2]
              + 2 * ne * 8 * fout * 4         # biases
              + 2 * tn * fout * 4)        # f32 output tile
        return max(k1, k2)

    if n <= 256:
        tn = n                            # single clean tile for small graphs
    else:
        tn = 256                          # MXU-friendly row tile (v5e splits it natively)
        while tn > 64 and vmem_bytes(tn) > budget:
            tn = _round8(tn // 2)
    limit = int(min(cap, max(vmem_bytes(tn) + (8 << 20), 32 << 20)))
    return tn, limit


# ----------------------------- Pallas kernels -----------------------------

def _layer1_kernel(a_ref, xf_ref, xt_ref, invd_ref, w_ref, b_ref, h1_ref):
    """Layer 1 of ALL encoders for one row tile.  grid = (row_tiles,)."""
    # Shared neighbor aggregation (unnormalized adjacency, then 1/deg row scale).
    agg = jnp.dot(a_ref[...], xf_ref[...], preferred_element_type=jnp.float32)
    agg = (agg * invd_ref[...]).astype(xt_ref.dtype)
    # One wide MXU matmul: K = 2*fin (fused lin_l/lin_r), (E+1)*hid output lanes.
    lhs = jnp.concatenate([agg, xt_ref[...]], axis=1)
    h = jnp.dot(lhs, w_ref[...], preferred_element_type=jnp.float32) + b_ref[...]
    h1_ref[...] = jnp.maximum(h, 0.0).astype(h1_ref.dtype)


def sage_layer1_all(adj, x, inv_deg, w1, b1, *, tn, vmem_limit):
    """h1[:, e*hid:(e+1)*hid] = relu((A @ X) @ Wl1[e] + X @ Wr1[e] + b1[e]) for all e."""
    n, fin = x.shape
    d1 = w1.shape[1]
    return pl.pallas_call(
        _layer1_kernel,
        out_shape=jax.ShapeDtypeStruct((n, d1), x.dtype),
        grid_spec=pltpu.PrefetchScalarGridSpec(
            num_scalar_prefetch=0,
            grid=(pl.cdiv(n, tn),),
            in_specs=[
                pl.BlockSpec((tn, n), lambda i: (i, 0)),        # adjacency row strip
                pl.BlockSpec((n, fin), lambda i: (0, 0)),       # resident X (contraction)
                pl.BlockSpec((tn, fin), lambda i: (i, 0)),      # X row tile (self term)
                pl.BlockSpec((tn, 1), lambda i: (i, 0)),        # 1/deg row tile
                pl.BlockSpec((2 * fin, d1), lambda i: (0, 0)),  # fused [Wl1; Wr1], all encoders
                pl.BlockSpec((1, d1), lambda i: (0, 0)),        # biases
            ],
            out_specs=pl.BlockSpec((tn, d1), lambda i: (i, 0)),
        ),
        compiler_params=pltpu.CompilerParams(
            dimension_semantics=("parallel",),
            vmem_limit_bytes=vmem_limit),
    )(adj, x, x, inv_deg, w1, b1)


def _make_layer2_kernel(ne, hid, fout):
    def kernel(a_ref, h1f_ref, h1t_ref, invd_ref, c_ref, w_ref, b_ref, o_ref):
        """Layer 2 of every encoder fused with the gate-weighted combine (one row tile)."""
        tn = a_ref.shape[0]
        # Shared aggregation over the WHOLE resident h1 stack: one wide matmul.
        agg = jnp.dot(a_ref[...], h1f_ref[...], preferred_element_type=jnp.float32)
        agg = (agg * invd_ref[...]).astype(h1t_ref.dtype)
        acc = jnp.zeros((tn, fout), jnp.float32)
        for e in range(ne):            # static unroll; encoder 0 = share expert (coeff 1)
            lo = e * hid
            lhs = jnp.concatenate(
                [agg[:, lo:lo + hid], h1t_ref[:, lo:lo + hid]], axis=1)
            h = jnp.dot(lhs, w_ref[e], preferred_element_type=jnp.float32) + b_ref[e]
            h = jnp.maximum(h, 0.0)
            acc = acc + c_ref[:, e:e + 1] * h
        o_ref[...] = acc
    return kernel


def sage_layer2_combine(adj, h1, inv_deg, coeff, w2, b2, *, hid, fout, tn, vmem_limit):
    """out = sum_e coeff[:, e] * relu((A @ h1_e) @ Wl2[e] + h1_e @ Wr2[e] + b2[e])."""
    n = adj.shape[0]
    ne = w2.shape[0]
    d1 = h1.shape[1]
    kernel = _make_layer2_kernel(ne, hid, fout)
    return pl.pallas_call(
        kernel,
        out_shape=jax.ShapeDtypeStruct((n, fout), jnp.float32),
        grid_spec=pltpu.PrefetchScalarGridSpec(
            num_scalar_prefetch=0,
            grid=(pl.cdiv(n, tn),),
            in_specs=[
                pl.BlockSpec((tn, n), lambda i: (i, 0)),               # adjacency row strip
                pl.BlockSpec((n, d1), lambda i: (0, 0)),               # resident h1 stack
                pl.BlockSpec((tn, d1), lambda i: (i, 0)),              # h1 row tile (self term)
                pl.BlockSpec((tn, 1), lambda i: (i, 0)),               # 1/deg row tile
                pl.BlockSpec((tn, ne), lambda i: (i, 0)),              # combine coefficients
                pl.BlockSpec((ne, 2 * hid, fout), lambda i: (0, 0, 0)),  # fused [Wl2; Wr2]
                pl.BlockSpec((ne, 1, fout), lambda i: (0, 0, 0)),        # biases
            ],
            out_specs=pl.BlockSpec((tn, fout), lambda i: (i, 0)),
        ),
        compiler_params=pltpu.CompilerParams(
            dimension_semantics=("parallel",),
            vmem_limit_bytes=vmem_limit),
    )(adj, h1, h1, inv_deg, coeff, w2, b2)


# ----------------------------- JAX glue -----------------------------

def build_mean_aggregation(edge_index, num_nodes, dtype):
    """Unnormalized adjacency (built directly in the compute dtype -> only one N^2 array
    in HBM) plus a (1/deg) column so the mean-normalization happens in-kernel."""
    src, dst = edge_index[0], edge_index[1]
    adj = jnp.zeros((num_nodes, num_nodes), dtype).at[dst, src].add(jnp.ones((), dtype))
    deg = adj.sum(axis=1, dtype=jnp.float32, keepdims=True)
    inv_deg = 1.0 / jnp.maximum(deg, 1.0)          # deg is an exact small integer count
    return adj, inv_deg


def sparse_moe_forward(params, x, edge_index):
    n, fin = x.shape
    cdt = COMPUTE_DTYPE
    adj, inv_deg = build_mean_aggregation(edge_index, n, cdt)

    # ---- sparse gating: tiny (N x E), lane-sparse op -> plain XLA ----
    scores = jax.nn.softmax(
        params["alpha"] * (x @ params["expert_vector_t"] + params["gate_bias"]), axis=-1)
    top_k = params["top_k"]
    num_experts = scores.shape[1]
    topw, topi = jax.lax.top_k(scores, top_k)
    topw = topw * params["route_scale"]
    onehot = jax.nn.one_hot(topi, num_experts, dtype=jnp.float32)       # [N, K, E]
    sparse_weights = jnp.einsum("nk,nke->ne", topw, onehot)             # scatter_
    # Exactly reproduce the reference combine indexing (its quirk included):
    # router_output += sparse_weights[:, i] * router_outputs[arange(N), expert_indices[:, i]]
    coeff_experts = jnp.einsum("nk,nke->ne", sparse_weights[:, :top_k], onehot)  # [N, E]
    # column 0 = share expert (coefficient 1), columns 1.. = routed experts
    coeff = jnp.concatenate([jnp.ones((n, 1), jnp.float32), coeff_experts], axis=1)

    # ---- stacked / fused encoder weights: [share, expert_0, ..., expert_{E-1}] ----
    encs = [params["share"]] + list(params["experts"])
    ne = len(encs)
    hid = encs[0][0][0].shape[1]
    fout = encs[0][1][0].shape[1]
    # layer 1: concat all encoders along the output dim and fuse lin_l/lin_r along K
    wl1 = jnp.concatenate([p[0][0] for p in encs], axis=1)              # (fin, (E+1)*hid)
    wr1 = jnp.concatenate([p[0][1] for p in encs], axis=1)
    w1 = jnp.concatenate([wl1, wr1], axis=0).astype(cdt)                # (2*fin, (E+1)*hid)
    b1 = jnp.concatenate([p[0][2] for p in encs], axis=1)               # (1, (E+1)*hid) f32
    # layer 2: per-encoder fused [Wl2; Wr2]
    w2 = jnp.stack([jnp.concatenate([p[1][0], p[1][1]], axis=0)
                    for p in encs]).astype(cdt)                         # (E+1, 2*hid, fout)
    b2 = jnp.stack([p[1][2] for p in encs])                             # (E+1, 1, fout) f32

    tn, vmem_limit = _plan_tiles(n, fin, hid, fout, ne)
    x_c = x.astype(cdt)

    h1 = sage_layer1_all(adj, x_c, inv_deg, w1, b1,
                         tn=tn, vmem_limit=vmem_limit)                  # (N, (E+1)*hid)
    moe_out = sage_layer2_combine(adj, h1, inv_deg, coeff, w2, b2,
                                  hid=hid, fout=fout,
                                  tn=tn, vmem_limit=vmem_limit)         # (N, fout)

    # TODO(synk): expert_counts is a persistent nn buffer updated in place in the
    # reference; returned here instead of being stored across calls.
    expert_counts = sparse_weights.sum(axis=0)
    return moe_out, sparse_weights, expert_counts


# ----------------------------- params -----------------------------

def init_params(key, input_dim, hidden, output_dim, num_experts, top_k):
    def sage_layer_params(k, fin, fout):
        k1, k2, k3 = jax.random.split(k, 3)
        s = 1.0 / float(fin) ** 0.5
        wl = jax.random.uniform(k1, (fin, fout), jnp.float32, -s, s)   # lin_l weight^T
        wr = jax.random.uniform(k2, (fin, fout), jnp.float32, -s, s)   # lin_r weight^T
        bl = jax.random.uniform(k3, (1, fout), jnp.float32, -s, s)     # lin_l bias
        return (wl, wr, bl)

    def sage_encoder_params(k):
        k1, k2 = jax.random.split(k)
        return [sage_layer_params(k1, input_dim, hidden),
                sage_layer_params(k2, hidden, output_dim)]

    keys = jax.random.split(key, num_experts + 3)
    s = 1.0 / float(input_dim) ** 0.5
    return {
        "share": sage_encoder_params(keys[0]),
        "experts": [sage_encoder_params(keys[1 + e]) for e in range(num_experts)],
        # expert_vector stored pre-transposed: [input_dim, num_experts]
        "expert_vector_t": jax.random.uniform(
            keys[num_experts + 1], (input_dim, num_experts), jnp.float32, -s, s),
        "gate_bias": jnp.zeros((1, num_experts), jnp.float32),
        "alpha": jnp.float32(0.5),   # nn.Parameter(torch.tensor(0.5)) at init
        "route_scale": 1.0,
        "top_k": top_k,
    }


# ----------------------------- reference (pure JAX, f32) -----------------------------

def reference_forward(params, x, edge_index):
    n = x.shape[0]
    src, dst = edge_index[0], edge_index[1]
    adj = jnp.zeros((n, n), jnp.float32).at[dst, src].add(1.0)
    deg = adj.sum(axis=1, keepdims=True)
    a = adj / jnp.where(deg > 0, deg, 1.0)

    def enc(p):
        h = x
        for wl, wr, bl in p:
            h = jnp.maximum((a @ h) @ wl + h @ wr + bl, 0.0)
        return h

    share = enc(params["share"])
    router = jnp.stack([enc(p) for p in params["experts"]], axis=0)
    scores = jax.nn.softmax(
        params["alpha"] * (x @ params["expert_vector_t"] + params["gate_bias"]), axis=-1)
    topw, topi = jax.lax.top_k(scores, params["top_k"])
    onehot = jax.nn.one_hot(topi, scores.shape[1], dtype=jnp.float32)
    sw = jnp.einsum("nk,nke->ne", topw * params["route_scale"], onehot)
    coeff = jnp.einsum("nk,nke->ne", sw[:, :params["top_k"]], onehot)
    return share + jnp.einsum("ne,end->nd", coeff, router)


# ----------------------------- main -----------------------------

if __name__ == "__main__":
    N = 64                # number of graph nodes
    INPUT_DIM = 128
    HIDDEN = 128
    OUTPUT_DIM = 128
    NUM_EXPERTS = 4
    TOP_K = 2
    NUM_EDGES = 256

    key = jax.random.PRNGKey(0)
    kx, ke, kp = jax.random.split(key, 3)
    x = jax.random.normal(kx, (N, INPUT_DIM), jnp.float32)
    edge_index = jax.random.randint(ke, (2, NUM_EDGES), 0, N, dtype=jnp.int32)

    params = init_params(kp, INPUT_DIM, HIDDEN, OUTPUT_DIM, NUM_EXPERTS, TOP_K)

    moe_out, gate_weights, expert_counts = sparse_moe_forward(params, x, edge_index)
    moe_out = jax.block_until_ready(moe_out)

    assert moe_out.shape == (N, OUTPUT_DIM)
    assert bool(jnp.isfinite(moe_out).all())

    ref = reference_forward(params, x, edge_index)
    rel_err = float(jnp.max(jnp.abs(moe_out - ref)) / (jnp.max(jnp.abs(ref)) + 1e-6))
    assert rel_err < 5e-2, f"mismatch vs reference: rel_err={rel_err}"

    print("KERNEL_OK")
</pallas_src>

<mosaic_0001>
module attributes {stable_mosaic.version = 11 : i64} {
  func.func @_layer1_kernel(%arg0: i32, %arg1: memref<64x64xbf16, #tpu.memory_space<vmem>>, %arg2: memref<64x128xbf16, #tpu.memory_space<vmem>>, %arg3: memref<64x128xbf16, #tpu.memory_space<vmem>>, %arg4: memref<64x1xf32, #tpu.memory_space<vmem>>, %arg5: memref<256x640xbf16, #tpu.memory_space<vmem>>, %arg6: memref<1x640xf32, #tpu.memory_space<vmem>>, %arg7: memref<64x640xbf16, #tpu.memory_space<vmem>>) attributes {dimension_semantics = [#tpu.dimension_semantics<parallel>], iteration_bounds = array<i64: 1>, scalar_prefetch = 0 : i64, scratch_operands = 0 : i64, tpu.core_type = #tpu.core_type<tc>, window_params = [{transform_indices = @transform_0, window_bounds = array<i64: 64, 64>}, {pipeline_mode = #tpu.pipeline_mode<synchronous>, transform_indices = @transform_1, window_bounds = array<i64: 64, 128>}, {transform_indices = @transform_2, window_bounds = array<i64: 64, 128>}, {transform_indices = @transform_3, window_bounds = array<i64: 64, 1>}, {pipeline_mode = #tpu.pipeline_mode<synchronous>, transform_indices = @transform_4, window_bounds = array<i64: 256, 640>}, {pipeline_mode = #tpu.pipeline_mode<synchronous>, transform_indices = @transform_5, window_bounds = array<i64: 1, 640>}, {transform_indices = @transform_6, window_bounds = array<i64: 64, 640>}]} {
    %c0 = arith.constant 0 : index
    %c0_0 = arith.constant 0 : index
    %0 = vector.load %arg1[%c0, %c0_0] : memref<64x64xbf16, #tpu.memory_space<vmem>>, vector<64x64xbf16>
    %c0_1 = arith.constant 0 : index
    %c0_2 = arith.constant 0 : index
    %1 = vector.load %arg2[%c0_1, %c0_2] : memref<64x128xbf16, #tpu.memory_space<vmem>>, vector<64x128xbf16>
    %cst = arith.constant dense<0.000000e+00> : vector<64x128xf32>
    %2 = tpu.matmul %0, %1, %cst {dimension_numbers = #tpu.dot_dimension_numbers<[1], [0], [0], [1], [0, 0, 1, 1], [], []>} : vector<64x64xbf16>, vector<64x128xbf16>, vector<64x128xf32> -> vector<64x128xf32>
    %c0_3 = arith.constant 0 : index
    %c0_4 = arith.constant 0 : index
    %3 = vector.load %arg4[%c0_3, %c0_4] : memref<64x1xf32, #tpu.memory_space<vmem>>, vector<64x1xf32>
    %4 = vector.broadcast %3 : vector<64x1xf32> to vector<64x128xf32>
    %5 = arith.mulf %2, %4 : vector<64x128xf32>
    %6 = arith.truncf %5 : vector<64x128xf32> to vector<64x128xbf16>
    %c0_5 = arith.constant 0 : index
    %c0_6 = arith.constant 0 : index
    %7 = vector.load %arg3[%c0_5, %c0_6] : memref<64x128xbf16, #tpu.memory_space<vmem>>, vector<64x128xbf16>
    %8 = tpu.concatenate %6, %7 in 1 : vector<64x128xbf16>, vector<64x128xbf16> -> vector<64x256xbf16>
    %c0_7 = arith.constant 0 : index
    %c0_8 = arith.constant 0 : index
    %9 = vector.load %arg5[%c0_7, %c0_8] : memref<256x640xbf16, #tpu.memory_space<vmem>>, vector<256x640xbf16>
    %cst_9 = arith.constant dense<0.000000e+00> : vector<64x640xf32>
    %10 = tpu.matmul %8, %9, %cst_9 {dimension_numbers = #tpu.dot_dimension_numbers<[1], [0], [0], [1], [0, 0, 1, 1], [], []>} : vector<64x256xbf16>, vector<256x640xbf16>, vector<64x640xf32> -> vector<64x640xf32>
    %c0_10 = arith.constant 0 : index
    %c0_11 = arith.constant 0 : index
    %11 = vector.load %arg6[%c0_10, %c0_11] : memref<1x640xf32, #tpu.memory_space<vmem>>, vector<1x640xf32>
    %12 = vector.broadcast %11 : vector<1x640xf32> to vector<64x640xf32>
    %13 = arith.addf %10, %12 : vector<64x640xf32>
    %cst_12 = arith.constant 0.000000e+00 : f32
    %14 = vector.broadcast %cst_12 : f32 to vector<64x640xf32>
    %15 = arith.maximumf %13, %14 : vector<64x640xf32>
    %16 = arith.truncf %15 : vector<64x640xf32> to vector<64x640xbf16>
    %c0_13 = arith.constant 0 : index
    %c0_14 = arith.constant 0 : index
    %17 = vector.load %arg7[%c0_13, %c0_14] : memref<64x640xbf16, #tpu.memory_space<vmem>>, vector<64x640xbf16>
    tpu.vector_store %arg7[%c0_13, %c0_14], %16 {strides = array<i32>} : memref<64x640xbf16, #tpu.memory_space<vmem>>, vector<64x640xbf16>,
    return
  }
  func.func @transform_0(%arg0: i32) -> (i32, i32) {
    %c0_i32 = arith.constant 0 : i32
    %c0_i32_0 = arith.constant 0 : i32
    return %arg0, %c0_i32 : i32, i32
  }
  func.func @transform_1(%arg0: i32) -> (i32, i32) {
    %c0_i32 = arith.constant 0 : i32
    %c0_i32_0 = arith.constant 0 : i32
    %c0_i32_1 = arith.constant 0 : i32
    return %c0_i32, %c0_i32_0 : i32, i32
  }
  func.func @transform_2(%arg0: i32) -> (i32, i32) {
    %c0_i32 = arith.constant 0 : i32
    %c0_i32_0 = arith.constant 0 : i32
    return %arg0, %c0_i32 : i32, i32
  }
  func.func @transform_3(%arg0: i32) -> (i32, i32) {
    %c0_i32 = arith.constant 0 : i32
    %c0_i32_0 = arith.constant 0 : i32
    return %arg0, %c0_i32 : i32, i32
  }
  func.func @transform_4(%arg0: i32) -> (i32, i32) {
    %c0_i32 = arith.constant 0 : i32
    %c0_i32_0 = arith.constant 0 : i32
    %c0_i32_1 = arith.constant 0 : i32
    return %c0_i32, %c0_i32_0 : i32, i32
  }
  func.func @transform_5(%arg0: i32) -> (i32, i32) {
    %c0_i32 = arith.constant 0 : i32
    %c0_i32_0 = arith.constant 0 : i32
    %c0_i32_1 = arith.constant 0 : i32
    return %c0_i32, %c0_i32_0 : i32, i32
  }
  func.func @transform_6(%arg0: i32) -> (i32, i32) {
    %c0_i32 = arith.constant 0 : i32
    %c0_i32_0 = arith.constant 0 : i32
    return %arg0, %c0_i32 : i32, i32
  }
}

</mosaic_0001>

<llo_original>
// kernel: tpu_custom_call.1
$region0: #{tpu_custom_call.1}
  #allocation0 [shape = 'u32[]', space=smem, size = 0x4, offset = 0x4, fixed_abs, tag = 'smem constant byte address 0x4 - core index']
  #allocation1 [shape = 'u32[144,128]{1,0:T(1,128)}', space=vmem, size = 0x12000, scoped, tag = 'internal scratch']
  %s0 = inlined_call_operand.vmem [shape: bf16[64,64], index: 0, kind: input, shape index: {}]
  %s1 = inlined_call_operand.vmem [shape: bf16[64,128], index: 1, kind: input, shape index: {}]
  %s2 = inlined_call_operand.hbm [shape: bf16[64,128], index: 2, kind: input, shape index: {}]
  %s3 = inlined_call_operand.vmem [shape: f32[64,1], index: 3, kind: input, shape index: {}]
  %s4 = inlined_call_operand.hbm [shape: bf16[256,640], index: 4, kind: input, shape index: {}]
  %s5 = inlined_call_operand.vmem [shape: f32[1,640], index: 5, kind: input, shape index: {}]
  %s6 = inlined_call_operand.hbm [shape: bf16[64,640], index: 6, kind: output, shape index: {}]
  %s7 = sld [smem:[#allocation0]]
  $region42: #{tpu_custom_call.1} parent=0
    _
  %s9 = ssub.s32 1, %s7
  %s10 = scalar_select 0, %s9, %s7
  $region1: #{tpu_custom_call.1} parent=0
    #allocation2 [shape = 'u8[16384]{0}', space=vmem, size = 0x4000, scoped, tag = 'input window, operand 2, single buffered']
    #allocation3 [shape = 's32[1]{0}', space=sflag, size = 0x4, scoped, tag = 'scoped memory for tpu_custom_call.1']
    #allocation4 [shape = 's32[1]{0}', space=sflag, size = 0x4, scoped, tag = 'scoped memory for tpu_custom_call.1']
    #allocation5 [shape = 'u8[327680]{0}', space=vmem, size = 0x50000, scoped, tag = 'input window, operand 4, single buffered']
    #allocation6 [shape = 's32[1]{0}', space=sflag, size = 0x4, scoped, tag = 'scoped memory for tpu_custom_call.1']
    #allocation7 [shape = 'u8[81920]{0}', space=vmem, size = 0x14000, scoped, tag = 'output window, operand 0, single buffered']
    %11 = vsyncpa [#allocation3], 0
    %12 = vsyncpa [#allocation6], 0
    %13 = vsyncpa [#allocation4], 0
    // Predicated region
    $region2: #{tpu_custom_call.1} parent=1 // pred_check
      _
    $region3: #{tpu_custom_call.1} parent=1 // pred_check_branch
      %15 = sbr.rel (0) target = $region5
    $region4: #{tpu_custom_call.1} parent=1 // pred_region
      _
    $region5: #{tpu_custom_call.1} parent=1 // pred_fallthru
      _
    // Predicated region
    $region6: #{tpu_custom_call.1} parent=1 // pred_check
      _
    $region7: #{tpu_custom_call.1} parent=1 // pred_check_branch
      %17 = sbr.rel (0) target = $region9
    $region8: #{tpu_custom_call.1} parent=1 // pred_region
      _
    $region9: #{tpu_custom_call.1} parent=1 // pred_fallthru
      _
    // Predicated region
    $region10: #{tpu_custom_call.1} parent=1 // pred_check
      _
    $region11: #{tpu_custom_call.1} parent=1 // pred_check_branch
      %19 = sbr.rel (0) target = $region13
    $region12: #{tpu_custom_call.1} parent=1 // pred_region
      %s21 = ssub.s32 512, 512
      %22 = vsyncadd [#allocation3], %s21
      %s23 = sshll.u32 [#allocation2], 4
      %s24 = int_to_ptr.vmem [resolvable:$true] %s23
      %29 = dma.hbm_to_vmem [thread:$0]  %s2, 512, %s24, [#allocation3], 64, 64, 4
    $region13: #{tpu_custom_call.1} parent=1 // pred_fallthru
      _
    // Predicated region
    $region14: #{tpu_custom_call.1} parent=1 // pred_check
      _
    $region15: #{tpu_custom_call.1} parent=1 // pred_check_branch
      %31 = sbr.rel (0) target = $region17
    $region16: #{tpu_custom_call.1} parent=1 // pred_region
      _
    $region17: #{tpu_custom_call.1} parent=1 // pred_fallthru
      _
    // Predicated region
    $region18: #{tpu_custom_call.1} parent=1 // pred_check
      _
    $region19: #{tpu_custom_call.1} parent=1 // pred_check_branch
      %33 = sbr.rel (0) target = $region21
    $region20: #{tpu_custom_call.1} parent=1 // pred_region
      %s35 = ssub.s32 10240, 10240
      %36 = vsyncadd [#allocation6], %s35
      %s37 = sshll.u32 [#allocation5], 4
      %s38 = int_to_ptr.vmem [resolvable:$true] %s37
      %43 = dma.hbm_to_vmem [thread:$0]  %s4, 10240, %s38, [#allocation6], 320, 320, 20
    $region21: #{tpu_custom_call.1} parent=1 // pred_fallthru
      _
    // Predicated region
    $region22: #{tpu_custom_call.1} parent=1 // pred_check
      _
    $region23: #{tpu_custom_call.1} parent=1 // pred_check_branch
      %45 = sbr.rel (0) target = $region25
    $region24: #{tpu_custom_call.1} parent=1 // pred_region
      _
    $region25: #{tpu_custom_call.1} parent=1 // pred_fallthru
      _
    // Predicated region
    $region26: #{tpu_custom_call.1} parent=1 // pred_check
      _
    $region27: #{tpu_custom_call.1} parent=1 // pred_check_branch
      %47 = sbr.rel (0) target = $region29
    $region28: #{tpu_custom_call.1} parent=1 // pred_region
      %48 = dma.done [#allocation3], 512
    $region29: #{tpu_custom_call.1} parent=1 // pred_fallthru
      _
    // Predicated region
    $region30: #{tpu_custom_call.1} parent=1 // pred_check
      _
    $region31: #{tpu_custom_call.1} parent=1 // pred_check_branch
      %50 = sbr.rel (0) target = $region33
    $region32: #{tpu_custom_call.1} parent=1 // pred_region
      %51 = dma.done [#allocation6], 10240
    $region33: #{tpu_custom_call.1} parent=1 // pred_fallthru
      _
    %v53 = vld [vmem:[%s0] sm:$0xf]
    %v54 = vld [vmem:[%s0 + $0x4] sm:$0xf]
    %v55 = vld [vmem:[%s0 + $0x8] sm:$0xf]
    %v56 = vld [vmem:[%s0 + $0xc] sm:$0xf]
    %v57 = vld [vmem:[%s0 + $0x10] sm:$0xf]
    %v58 = vld [vmem:[%s0 + $0x14] sm:$0xf]
    %v59 = vld [vmem:[%s0 + $0x18] sm:$0xf]
    %v60 = vld [vmem:[%s0 + $0x1c] sm:$0xf]
    %v61 = vld [vmem:[%s1] sm:$0xf]
    %v62 = vld [vmem:[%s1 + $0x4] sm:$0xf]
    %v63 = vld [vmem:[%s1 + $0x8] sm:$0xf]
    %v64 = vld [vmem:[%s1 + $0xc] sm:$0xf]
    %v65 = vld [vmem:[%s1 + $0x10] sm:$0xf]
    %v66 = vld [vmem:[%s1 + $0x14] sm:$0xf]
    %v67 = vld [vmem:[%s1 + $0x18] sm:$0xf]
    %v68 = vld [vmem:[%s1 + $0x1c] sm:$0xf]
    %v77 = vunpack.c.l.b16 %v53
    %v78 = vunpack.c.l.b16 %v54
    %v79 = vunpack.c.l.b16 %v55
    %v80 = vunpack.c.l.b16 %v56
    %v81 = vunpack.c.l.b16 %v57
    %v82 = vunpack.c.l.b16 %v58
    %v83 = vunpack.c.l.b16 %v59
    %v84 = vunpack.c.l.b16 %v60
    %v85 = vpack.c.b16 %v78, %v77
    %v86 = vpack.c.b16 %v80, %v79
    %v87 = vpack.c.b16 %v82, %v81
    %v88 = vpack.c.b16 %v84, %v83
    %v97 = vunpack.c.l.b16 %v61
    %v98 = vunpack.c.l.b16 %v62
    %v99 = vunpack.c.l.b16 %v63
    %v100 = vunpack.c.l.b16 %v64
    %v101 = vunpack.c.l.b16 %v65
    %v102 = vunpack.c.l.b16 %v66
    %v103 = vunpack.c.l.b16 %v67
    %v104 = vunpack.c.l.b16 %v68
    %v105 = vpack.c.b16 %v98, %v97
    %v106 = vpack.c.b16 %v100, %v99
    %v107 = vpack.c.b16 %v102, %v101
    %v108 = vpack.c.b16 %v104, %v103
    %vm113 = vcmask 523264
    %v115 = vsel %vm113, %v85, 0
    %v118 = vsel %vm113, %v86, 0
    %v121 = vsel %vm113, %v87, 0
    %v124 = vsel %vm113, %v88, 0
    %126 = vmatprep.subr.bf16.mxu0 0
    %127 = vmatpush1.bf16.msra.mxu0 %v105
    %128 = vmatprep.subr.bf16.mxu0 0
    %129 = vmatpush1.bf16.msra.mxu0 %v106
    %130 = vmatprep.subr.bf16.mxu0 0
    %131 = vmatpush1.bf16.msra.mxu0 %v107
    %132 = vmatprep.subr.bf16.mxu0 0
    %133 = vmatpush1.bf16.msra.mxu0 %v108
    %134 = vmatprep.subr.bf16.mxu0 0
    %135 = vmatpush1.bf16.msra.mxu0 0
    %136 = vmatprep.subr.bf16.mxu0 0
    %137 = vmatpush1.bf16.msra.mxu0 0
    %138 = vmatprep.subr.bf16.mxu0 0
    %139 = vmatpush1.bf16.msra.mxu0 0
    %140 = vmatprep.subr.bf16.mxu0 0
    %141 = vmatpush1.bf16.msra.mxu0 0
    %142 = vmatprep.subr.bf16.mxu0 0
    %143 = vmatpush1.bf16.msra.mxu0 0
    %144 = vmatprep.subr.bf16.mxu0 0
    %145 = vmatpush1.bf16.msra.mxu0 0
    %146 = vmatprep.subr.bf16.mxu0 0
    %147 = vmatpush1.bf16.msra.mxu0 0
    %148 = vmatprep.subr.bf16.mxu0 0
    %149 = vmatpush1.bf16.msra.mxu0 0
    %150 = vmatprep.subr.bf16.mxu0 0
    %151 = vmatpush1.bf16.msra.mxu0 0
    %152 = vmatprep.subr.bf16.mxu0 0
    %153 = vmatpush1.bf16.msra.mxu0 0
    %154 = vmatprep.subr.bf16.mxu0 0
    %155 = vmatpush1.bf16.msra.mxu0 0
    %156 = vmatprep.subr.bf16.mxu0 0
    %157 = vmatpush1.bf16.msra.mxu0 0
    %158 = vmatprep.mubr.bf16.mxu0 0
    %159 = vmatmul.mubr.bf16.gmra.mrb[0].mxu0 %v115
    %v160 = vpop.f32.mrb[0].mxu0
    %v161 = vadd.f32 0.0, %v160
    %v162 = vpop.f32.mrb[0].mxu0
    %v163 = vpop.f32.mrb[0].mxu0
    %v164 = vadd.f32 0.0, %v163
    %v165 = vpop.f32.mrb[0].mxu0
    %166 = vmatprep.mubr.bf16.mxu0 0
    %167 = vmatmul.mubr.bf16.gmra.mrb[0].mxu0 %v118
    %v168 = vpop.f32.mrb[0].mxu0
    %v169 = vadd.f32 0.0, %v168
    %v170 = vpop.f32.mrb[0].mxu0
    %v171 = vpop.f32.mrb[0].mxu0
    %v172 = vadd.f32 0.0, %v171
    %v173 = vpop.f32.mrb[0].mxu0
    %174 = vmatprep.mubr.bf16.mxu0 0
    %175 = vmatmul.mubr.bf16.gmra.mrb[0].mxu0 %v121
    %v176 = vpop.f32.mrb[0].mxu0
    %v177 = vadd.f32 0.0, %v176
    %v178 = vpop.f32.mrb[0].mxu0
    %v179 = vpop.f32.mrb[0].mxu0
    %v180 = vadd.f32 0.0, %v179
    %v181 = vpop.f32.mrb[0].mxu0
    %182 = vmatprep.mubr.bf16.mxu0 0
    %183 = vmatmul.mubr.bf16.gmra.mrb[0].mxu0 %v124
    %v184 = vpop.f32.mrb[0].mxu0
    %v185 = vadd.f32 0.0, %v184
    %v186 = vpop.f32.mrb[0].mxu0
    %v187 = vpop.f32.mrb[0].mxu0
    %v188 = vadd.f32 0.0, %v187
    %v189 = vpop.f32.mrb[0].mxu0
    %190 = vdwg.mxu0
    %v191 = vld [vmem:[%s3] sm:$0xff]
    %v192 = vld [vmem:[%s3 + $0x8] sm:$0xff]
    %v193 = vld [vmem:[%s3 + $0x10] sm:$0xff]
    %v194 = vld [vmem:[%s3 + $0x18] sm:$0xff]
    %v195 = vld [vmem:[%s3 + $0x20] sm:$0xff]
    %v196 = vld [vmem:[%s3 + $0x28] sm:$0xff]
    %v197 = vld [vmem:[%s3 + $0x30] sm:$0xff]
    %v198 = vld [vmem:[%s3 + $0x38] sm:$0xff]
    %200 = vset.pattern.permute.xlu0 0
    %201 = vperm.xlu0 %200, %v191
    %v202 = vpop.permute.xlu0 %201
    %205 = vset.pattern.permute.xlu0 0
    %206 = vperm.xlu0 %205, %v192
    %v207 = vpop.permute.xlu0 %206
    %210 = vset.pattern.permute.xlu0 0
    %211 = vperm.xlu0 %210, %v193
    %v212 = vpop.permute.xlu0 %211
    %215 = vset.pattern.permute.xlu0 0
    %216 = vperm.xlu0 %215, %v194
    %v217 = vpop.permute.xlu0 %216
    %220 = vset.pattern.permute.xlu0 0
    %221 = vperm.xlu0 %220, %v195
    %v222 = vpop.permute.xlu0 %221
    %225 = vset.pattern.permute.xlu0 0
    %226 = vperm.xlu0 %225, %v196
    %v227 = vpop.permute.xlu0 %226
    %230 = vset.pattern.permute.xlu0 0
    %231 = vperm.xlu0 %230, %v197
    %v232 = vpop.permute.xlu0 %231
    %235 = vset.pattern.permute.xlu0 0
    %236 = vperm.xlu0 %235, %v198
    %v237 = vpop.permute.xlu0 %236
    %v239 = vmul.f32 %v161, %v202
    %v240 = vmul.f32 %v164, %v207
    %v241 = vmul.f32 %v169, %v212
    %v242 = vmul.f32 %v172, %v217
    %v243 = vmul.f32 %v177, %v222
    %v244 = vmul.f32 %v180, %v227
    %v245 = vmul.f32 %v185, %v232
    %v246 = vmul.f32 %v188, %v237
    %v247 = vpack.c.bf16 %v240, %v239
    %v248 = vpack.c.bf16 %v242, %v241
    %v249 = vpack.c.bf16 %v244, %v243
    %v250 = vpack.c.bf16 %v246, %v245
    %v251 = vld [vmem:[#allocation2] sm:$0xf]
    %v252 = vld [vmem:[#allocation2 + $0x4] sm:$0xf]
    %v253 = vld [vmem:[#allocation2 + $0x8] sm:$0xf]
    %v254 = vld [vmem:[#allocation2 + $0xc] sm:$0xf]
    %v255 = vld [vmem:[#allocation2 + $0x10] sm:$0xf]
    %v256 = vld [vmem:[#allocation2 + $0x14] sm:$0xf]
    %v257 = vld [vmem:[#allocation2 + $0x18] sm:$0xf]
    %v258 = vld [vmem:[#allocation2 + $0x1c] sm:$0xf]
    %v267 = vunpack.c.l.b16 %v251
    %v268 = vunpack.c.l.b16 %v252
    %v269 = vunpack.c.l.b16 %v253
    %v270 = vunpack.c.l.b16 %v254
    %v271 = vunpack.c.l.b16 %v255
    %v272 = vunpack.c.l.b16 %v256
    %v273 = vunpack.c.l.b16 %v257
    %v274 = vunpack.c.l.b16 %v258
    %v275 = vpack.c.b16 %v268, %v267
    %v276 = vpack.c.b16 %v270, %v269
    %v277 = vpack.c.b16 %v272, %v271
    %v278 = vpack.c.b16 %v274, %v273
    %v283 = vld [vmem:[#allocation5] sm:$0xff]
    %v284 = vld [vmem:[#allocation5 + $0x8] sm:$0xff]
    %v285 = vld [vmem:[#allocation5 + $0x10] sm:$0xf]
    %v286 = vld [vmem:[#allocation5 + $0x14] sm:$0xff]
    %v287 = vld [vmem:[#allocation5 + $0x1c] sm:$0xff]
    %v288 = vld [vmem:[#allocation5 + $0x24] sm:$0xf]
    %v289 = vld [vmem:[#allocation5 + $0x28] sm:$0xff]
    %v290 = vld [vmem:[#allocation5 + $0x30] sm:$0xff]
    %v291 = vld [vmem:[#allocation5 + $0x38] sm:$0xf]
    %v292 = vld [vmem:[#allocation5 + $0x3c] sm:$0xff]
    %v293 = vld [vmem:[#allocation5 + $0x44] sm:$0xff]
    %v294 = vld [vmem:[#allocation5 + $0x4c] sm:$0xf]
    %v295 = vld [vmem:[#allocation5 + $0x50] sm:$0xff]
    %v296 = vld [vmem:[#allocation5 + $0x58] sm:$0xff]
    %v297 = vld [vmem:[#allocation5 + $0x60] sm:$0xf]
    %v298 = vld [vmem:[#allocation5 + $0x64] sm:$0xff]
    %v299 = vld [vmem:[#allocation5 + $0x6c] sm:$0xff]
    %v300 = vld [vmem:[#allocation5 + $0x74] sm:$0xf]
    %v301 = vld [vmem:[#allocation5 + $0x78] sm:$0xff]
    %v302 = vld [vmem:[#allocation5 + $0x80] sm:$0xff]
    %v303 = vld [vmem:[#allocation5 + $0x88] sm:$0xf]
    %v304 = vld [vmem:[#allocation5 + $0x8c] sm:$0xff]
    %v305 = vld [vmem:[#allocation5 + $0x94] sm:$0xff]
    %v306 = vld [vmem:[#allocation5 + $0x9c] sm:$0xf]
    %v307 = vld [vmem:[#allocation5 + $0xa0] sm:$0xff]
    %v308 = vld [vmem:[#allocation5 + $0xa8] sm:$0xff]
    %v309 = vld [vmem:[#allocation5 + $0xb0] sm:$0xf]
    %v310 = vld [vmem:[#allocation5 + $0xb4] sm:$0xff]
    %v311 = vld [vmem:[#allocation5 + $0xbc] sm:$0xff]
    %v312 = vld [vmem:[#allocation5 + $0xc4] sm:$0xf]
    %v313 = vld [vmem:[#allocation5 + $0xc8] sm:$0xff]
    %v314 = vld [vmem:[#allocation5 + $0xd0] sm:$0xff]
    %v315 = vld [vmem:[#allocation5 + $0xd8] sm:$0xf]
    %v316 = vld [vmem:[#allocation5 + $0xdc] sm:$0xff]
    %v317 = vld [vmem:[#allocation5 + $0xe4] sm:$0xff]
    %v318 = vld [vmem:[#allocation5 + $0xec] sm:$0xf]
    %v319 = vld [vmem:[#allocation5 + $0xf0] sm:$0xff]
    %v320 = vld [vmem:[#allocation5 + $0xf8] sm:$0xff]
    %v321 = vld [vmem:[#allocation5 + $0x100] sm:$0xf]
    %v322 = vld [vmem:[#allocation5 + $0x104] sm:$0xff]
    %v323 = vld [vmem:[#allocation5 + $0x10c] sm:$0xff]
    %v324 = vld [vmem:[#allocation5 + $0x114] sm:$0xf]
    %v325 = vld [vmem:[#allocation5 + $0x118] sm:$0xff]
    %v326 = vld [vmem:[#allocation5 + $0x120] sm:$0xff]
    %v327 = vld [vmem:[#allocation5 + $0x128] sm:$0xf]
    %v328 = vld [vmem:[#allocation5 + $0x12c] sm:$0xff]
    %v329 = vld [vmem:[#allocation5 + $0x134] sm:$0xff]
    %v330 = vld [vmem:[#allocation5 + $0x13c] sm:$0xf]
    %v331 = vld [vmem:[#allocation5 + $0x140] sm:$0xff]
    %v332 = vld [vmem:[#allocation5 + $0x148] sm:$0xff]
    %v333 = vld [vmem:[#allocation5 + $0x150] sm:$0xf]
    %v334 = vld [vmem:[#allocation5 + $0x154] sm:$0xff]
    %v335 = vld [vmem:[#allocation5 + $0x15c] sm:$0xff]
    %v336 = vld [vmem:[#allocation5 + $0x164] sm:$0xf]
    %v337 = vld [vmem:[#allocation5 + $0x168] sm:$0xff]
    %v338 = vld [vmem:[#allocation5 + $0x170] sm:$0xff]
    %v339 = vld [vmem:[#allocation5 + $0x178] sm:$0xf]
    %v340 = vld [vmem:[#allocation5 + $0x17c] sm:$0xff]
    %v341 = vld [vmem:[#allocation5 + $0x184] sm:$0xff]
    %v342 = vld [vmem:[#allocation5 + $0x18c] sm:$0xf]
    %v343 = vld [vmem:[#allocation5 + $0x190] sm:$0xff]
    %v344 = vld [vmem:[#allocation5 + $0x198] sm:$0xff]
    %v345 = vld [vmem:[#allocation5 + $0x1a0] sm:$0xf]
    %v346 = vld [vmem:[#allocation5 + $0x1a4] sm:$0xff]
    %v347 = vld [vmem:[#allocation5 + $0x1ac] sm:$0xff]
    %v348 = vld [vmem:[#allocation5 + $0x1b4] sm:$0xf]
    %v349 = vld [vmem:[#allocation5 + $0x1b8] sm:$0xff]
    %v350 = vld [vmem:[#allocation5 + $0x1c0] sm:$0xff]
    %v351 = vld [vmem:[#allocation5 + $0x1c8] sm:$0xf]
    %v352 = vld [vmem:[#allocation5 + $0x1cc] sm:$0xff]
    %v353 = vld [vmem:[#allocation5 + $0x1d4] sm:$0xff]
    %v354 = vld [vmem:[#allocation5 + $0x1dc] sm:$0xf]
    %v355 = vld [vmem:[#allocation5 + $0x1e0] sm:$0xff]
    %v356 = vld [vmem:[#allocation5 + $0x1e8] sm:$0xff]
    %v357 = vld [vmem:[#allocation5 + $0x1f0] sm:$0xf]
    %v358 = vld [vmem:[#allocation5 + $0x1f4] sm:$0xff]
    %v359 = vld [vmem:[#allocation5 + $0x1fc] sm:$0xff]
    %v360 = vld [vmem:[#allocation5 + $0x204] sm:$0xf]
    %v361 = vld [vmem:[#allocation5 + $0x208] sm:$0xff]
    %v362 = vld [vmem:[#allocation5 + $0x210] sm:$0xff]
    %v363 = vld [vmem:[#allocation5 + $0x218] sm:$0xf]
    %v364 = vld [vmem:[#allocation5 + $0x21c] sm:$0xff]
    %v365 = vld [vmem:[#allocation5 + $0x224] sm:$0xff]
    %v366 = vld [vmem:[#allocation5 + $0x22c] sm:$0xf]
    %v367 = vld [vmem:[#allocation5 + $0x230] sm:$0xff]
    %v368 = vld [vmem:[#allocation5 + $0x238] sm:$0xff]
    %v369 = vld [vmem:[#allocation5 + $0x240] sm:$0xf]
    %v370 = vld [vmem:[#allocation5 + $0x244] sm:$0xff]
    %v371 = vld [vmem:[#allocation5 + $0x24c] sm:$0xff]
    %v372 = vld [vmem:[#allocation5 + $0x254] sm:$0xf]
    %v373 = vld [vmem:[#allocation5 + $0x258] sm:$0xff]
    %v374 = vld [vmem:[#allocation5 + $0x260] sm:$0xff]
    %v375 = vld [vmem:[#allocation5 + $0x268] sm:$0xf]
    %v376 = vld [vmem:[#allocation5 + $0x26c] sm:$0xff]
    %v377 = vld [vmem:[#allocation5 + $0x274] sm:$0xff]
    %v378 = vld [vmem:[#allocation5 + $0x27c] sm:$0xf]
    %v379 = vld [vmem:[%s5] sm:$0x1f]
    %v381 = vlaneseq
    %v382 = vshrl.u32 %v381, 7
    %v383 = vsub.s32 0, %v382
    %v384 = vrot.slane %v379, %v383
    %v385 = vlaneseq
    %v386 = vshrl.u32 %v385, 7
    %v387 = vsub.s32 1, %v386
    %v388 = vrot.slane %v379, %v387
    %v389 = vlaneseq
    %v390 = vshrl.u32 %v389, 7
    %v391 = vsub.s32 2, %v390
    %v392 = vrot.slane %v379, %v391
    %v393 = vlaneseq
    %v394 = vshrl.u32 %v393, 7
    %v395 = vsub.s32 3, %v394
    %v396 = vrot.slane %v379, %v395
    %v397 = vlaneseq
    %v398 = vshrl.u32 %v397, 7
    %v399 = vsub.s32 4, %v398
    %v400 = vrot.slane %v379, %v399
    %v502 = vunpack.c.l.b16 %v283
    %v503 = vunpack.c.h.b16 %v283
    %v504 = vunpack.c.l.b16 %v284
    %v505 = vunpack.c.h.b16 %v284
    %v506 = vunpack.c.l.b16 %v285
    %v507 = vunpack.c.l.b16 %v286
    %v508 = vunpack.c.h.b16 %v286
    %v509 = vunpack.c.l.b16 %v287
    %v510 = vunpack.c.h.b16 %v287
    %v511 = vunpack.c.l.b16 %v288
    %v512 = vunpack.c.l.b16 %v289
    %v513 = vunpack.c.h.b16 %v289
    %v514 = vunpack.c.l.b16 %v290
    %v515 = vunpack.c.h.b16 %v290
    %v516 = vunpack.c.l.b16 %v291
    %v517 = vunpack.c.l.b16 %v292
    %v518 = vunpack.c.h.b16 %v292
    %v519 = vunpack.c.l.b16 %v293
    %v520 = vunpack.c.h.b16 %v293
    %v521 = vunpack.c.l.b16 %v294
    %v522 = vunpack.c.l.b16 %v295
    %v523 = vunpack.c.h.b16 %v295
    %v524 = vunpack.c.l.b16 %v296
    %v525 = vunpack.c.h.b16 %v296
    %v526 = vunpack.c.l.b16 %v297
    %v527 = vunpack.c.l.b16 %v298
    %v528 = vunpack.c.h.b16 %v298
    %v529 = vunpack.c.l.b16 %v299
    %v530 = vunpack.c.h.b16 %v299
    %v531 = vunpack.c.l.b16 %v300
    %v532 = vunpack.c.l.b16 %v301
    %v533 = vunpack.c.h.b16 %v301
    %v534 = vunpack.c.l.b16 %v302
    %v535 = vunpack.c.h.b16 %v302
    %v536 = vunpack.c.l.b16 %v303
    %v537 = vunpack.c.l.b16 %v304
    %v538 = vunpack.c.h.b16 %v304
    %v539 = vunpack.c.l.b16 %v305
    %v540 = vunpack.c.h.b16 %v305
    %v541 = vunpack.c.l.b16 %v306
    %v542 = vunpack.c.l.b16 %v307
    %v543 = vunpack.c.h.b16 %v307
    %v544 = vunpack.c.l.b16 %v308
    %v545 = vunpack.c.h.b16 %v308
    %v546 = vunpack.c.l.b16 %v309
    %v547 = vunpack.c.l.b16 %v310
    %v548 = vunpack.c.h.b16 %v310
    %v549 = vunpack.c.l.b16 %v311
    %v550 = vunpack.c.h.b16 %v311
    %v551 = vunpack.c.l.b16 %v312
    %v552 = vunpack.c.l.b16 %v313
    %v553 = vunpack.c.h.b16 %v313
    %v554 = vunpack.c.l.b16 %v314
    %v555 = vunpack.c.h.b16 %v314
    %v556 = vunpack.c.l.b16 %v315
    %v557 = vunpack.c.l.b16 %v316
    %v558 = vunpack.c.h.b16 %v316
    %v559 = vunpack.c.l.b16 %v317
    %v560 = vunpack.c.h.b16 %v317
    %v561 = vunpack.c.l.b16 %v318
    %v562 = vunpack.c.l.b16 %v319
    %v563 = vunpack.c.h.b16 %v319
    %v564 = vunpack.c.l.b16 %v320
    %v565 = vunpack.c.h.b16 %v320
    %v566 = vunpack.c.l.b16 %v321
    %v567 = vunpack.c.l.b16 %v322
    %v568 = vunpack.c.h.b16 %v322
    %v569 = vunpack.c.l.b16 %v323
    %v570 = vunpack.c.h.b16 %v323
    %v571 = vunpack.c.l.b16 %v324
    %v572 = vunpack.c.l.b16 %v325
    %v573 = vunpack.c.h.b16 %v325
    %v574 = vunpack.c.l.b16 %v326
    %v575 = vunpack.c.h.b16 %v326
    %v576 = vunpack.c.l.b16 %v327
    %v577 = vunpack.c.l.b16 %v328
    %v578 = vunpack.c.h.b16 %v328
    %v579 = vunpack.c.l.b16 %v329
    %v580 = vunpack.c.h.b16 %v329
    %v581 = vunpack.c.l.b16 %v330
    %v582 = vunpack.c.l.b16 %v331
    %v583 = vunpack.c.h.b16 %v331
    %v584 = vunpack.c.l.b16 %v332
    %v585 = vunpack.c.h.b16 %v332
    %v586 = vunpack.c.l.b16 %v333
    %v587 = vunpack.c.l.b16 %v334
    %v588 = vunpack.c.h.b16 %v334
    %v589 = vunpack.c.l.b16 %v335
    %v590 = vunpack.c.h.b16 %v335
    %v591 = vunpack.c.l.b16 %v336
    %v592 = vunpack.c.l.b16 %v337
    %v593 = vunpack.c.h.b16 %v337
    %v594 = vunpack.c.l.b16 %v338
    %v595 = vunpack.c.h.b16 %v338
    %v596 = vunpack.c.l.b16 %v339
    %v597 = vunpack.c.l.b16 %v340
    %v598 = vunpack.c.h.b16 %v340
    %v599 = vunpack.c.l.b16 %v341
    %v600 = vunpack.c.h.b16 %v341
    %v601 = vunpack.c.l.b16 %v342
    %v602 = vunpack.c.l.b16 %v343
    %v603 = vunpack.c.h.b16 %v343
    %v604 = vunpack.c.l.b16 %v344
    %v605 = vunpack.c.h.b16 %v344
    %v606 = vunpack.c.l.b16 %v345
    %v607 = vunpack.c.l.b16 %v346
    %v608 = vunpack.c.h.b16 %v346
    %v609 = vunpack.c.l.b16 %v347
    %v610 = vunpack.c.h.b16 %v347
    %v611 = vunpack.c.l.b16 %v348
    %v612 = vunpack.c.l.b16 %v349
    %v613 = vunpack.c.h.b16 %v349
    %v614 = vunpack.c.l.b16 %v350
    %v615 = vunpack.c.h.b16 %v350
    %v616 = vunpack.c.l.b16 %v351
    %v617 = vunpack.c.l.b16 %v352
    %v618 = vunpack.c.h.b16 %v352
    %v619 = vunpack.c.l.b16 %v353
    %v620 = vunpack.c.h.b16 %v353
    %v621 = vunpack.c.l.b16 %v354
    %v622 = vunpack.c.l.b16 %v355
    %v623 = vunpack.c.h.b16 %v355
    %v624 = vunpack.c.l.b16 %v356
    %v625 = vunpack.c.h.b16 %v356
    %v626 = vunpack.c.l.b16 %v357
    %v627 = vunpack.c.l.b16 %v358
    %v628 = vunpack.c.h.b16 %v358
    %v629 = vunpack.c.l.b16 %v359
    %v630 = vunpack.c.h.b16 %v359
    %v631 = vunpack.c.l.b16 %v360
    %v632 = vunpack.c.l.b16 %v361
    %v633 = vunpack.c.h.b16 %v361
    %v634 = vunpack.c.l.b16 %v362
    %v635 = vunpack.c.h.b16 %v362
    %v636 = vunpack.c.l.b16 %v363
    %v637 = vunpack.c.l.b16 %v364
    %v638 = vunpack.c.h.b16 %v364
    %v639 = vunpack.c.l.b16 %v365
    %v640 = vunpack.c.h.b16 %v365
    %v641 = vunpack.c.l.b16 %v366
    %v642 = vunpack.c.l.b16 %v367
    %v643 = vunpack.c.h.b16 %v367
    %v644 = vunpack.c.l.b16 %v368
    %v645 = vunpack.c.h.b16 %v368
    %v646 = vunpack.c.l.b16 %v369
    %v647 = vunpack.c.l.b16 %v370
    %v648 = vunpack.c.h.b16 %v370
    %v649 = vunpack.c.l.b16 %v371
    %v650 = vunpack.c.h.b16 %v371
    %v651 = vunpack.c.l.b16 %v372
    %v652 = vunpack.c.l.b16 %v373
    %v653 = vunpack.c.h.b16 %v373
    %v654 = vunpack.c.l.b16 %v374
    %v655 = vunpack.c.h.b16 %v374
    %v656 = vunpack.c.l.b16 %v375
    %v657 = vunpack.c.l.b16 %v376
    %v658 = vunpack.c.h.b16 %v376
    %v659 = vunpack.c.l.b16 %v377
    %v660 = vunpack.c.h.b16 %v377
    %v661 = vunpack.c.l.b16 %v378
    %v662 = vpack.c.b16 %v507, %v502
    %v663 = vpack.c.b16 %v508, %v503
    %v664 = vpack.c.b16 %v509, %v504
    %v665 = vpack.c.b16 %v510, %v505
    %v666 = vpack.c.b16 %v511, %v506
    %v667 = vpack.c.b16 %v517, %v512
    %v668 = vpack.c.b16 %v518, %v513
    %v669 = vpack.c.b16 %v519, %v514
    %v670 = vpack.c.b16 %v520, %v515
    %v671 = vpack.c.b16 %v521, %v516
    %v672 = vpack.c.b16 %v527, %v522
    %v673 = vpack.c.b16 %v528, %v523
    %v674 = vpack.c.b16 %v529, %v524
    %v675 = vpack.c.b16 %v530, %v525
    %v676 = vpack.c.b16 %v531, %v526
    %v677 = vpack.c.b16 %v537, %v532
    %v678 = vpack.c.b16 %v538, %v533
    %v679 = vpack.c.b16 %v539, %v534
    %v680 = vpack.c.b16 %v540, %v535
    %v681 = vpack.c.b16 %v541, %v536
    %v682 = vpack.c.b16 %v547, %v542
    %v683 = vpack.c.b16 %v548, %v543
    %v684 = vpack.c.b16 %v549, %v544
    %v685 = vpack.c.b16 %v550, %v545
    %v686 = vpack.c.b16 %v551, %v546
    %v687 = vpack.c.b16 %v557, %v552
    %v688 = vpack.c.b16 %v558, %v553
    %v689 = vpack.c.b16 %v559, %v554
    %v690 = vpack.c.b16 %v560, %v555
    %v691 = vpack.c.b16 %v561, %v556
    %v692 = vpack.c.b16 %v567, %v562
    %v693 = vpack.c.b16 %v568, %v563
    %v694 = vpack.c.b16 %v569, %v564
    %v695 = vpack.c.b16 %v570, %v565
    %v696 = vpack.c.b16 %v571, %v566
    %v697 = vpack.c.b16 %v577, %v572
    %v698 = vpack.c.b16 %v578, %v573
    %v699 = vpack.c.b16 %v579, %v574
    %v700 = vpack.c.b16 %v580, %v575
    %v701 = vpack.c.b16 %v581, %v576
    %v702 = vpack.c.b16 %v587, %v582
    %v703 = vpack.c.b16 %v588, %v583
    %v704 = vpack.c.b16 %v589, %v584
    %v705 = vpack.c.b16 %v590, %v585
    %v706 = vpack.c.b16 %v591, %v586
    %v707 = vpack.c.b16 %v597, %v592
    %v708 = vpack.c.b16 %v598, %v593
    %v709 = vpack.c.b16 %v599, %v594
    %v710 = vpack.c.b16 %v600, %v595
    %v711 = vpack.c.b16 %v601, %v596
    %v712 = vpack.c.b16 %v607, %v602
    %v713 = vpack.c.b16 %v608, %v603
    %v714 = vpack.c.b16 %v609, %v604
    %v715 = vpack.c.b16 %v610, %v605
    %v716 = vpack.c.b16 %v611, %v606
    %v717 = vpack.c.b16 %v617, %v612
    %v718 = vpack.c.b16 %v618, %v613
    %v719 = vpack.c.b16 %v619, %v614
    %v720 = vpack.c.b16 %v620, %v615
    %v721 = vpack.c.b16 %v621, %v616
    %v722 = vpack.c.b16 %v627, %v622
    %v723 = vpack.c.b16 %v628, %v623
    %v724 = vpack.c.b16 %v629, %v624
    %v725 = vpack.c.b16 %v630, %v625
    %v726 = vpack.c.b16 %v631, %v626
    %v727 = vpack.c.b16 %v637, %v632
    %v728 = vpack.c.b16 %v638, %v633
    %v729 = vpack.c.b16 %v639, %v634
    %v730 = vpack.c.b16 %v640, %v635
    %v731 = vpack.c.b16 %v641, %v636
    %v732 = vpack.c.b16 %v647, %v642
    %v733 = vpack.c.b16 %v648, %v643
    %v734 = vpack.c.b16 %v649, %v644
    %v735 = vpack.c.b16 %v650, %v645
    %v736 = vpack.c.b16 %v651, %v646
    %v737 = vpack.c.b16 %v657, %v652
    %v738 = vpack.c.b16 %v658, %v653
    %v739 = vpack.c.b16 %v659, %v654
    %v740 = vpack.c.b16 %v660, %v655
    %v741 = vpack.c.b16 %v661, %v656
    %822 = vmatprep.subr.bf16.mxu0 %v663
    %823 = vmatpush1.bf16.msra.mxu0 %v662
    %824 = vmatprep.subr.bf16.mxu0 %v668
    %825 = vmatpush1.bf16.msra.mxu0 %v667
    %826 = vmatprep.subr.bf16.mxu0 %v673
    %827 = vmatpush1.bf16.msra.mxu0 %v672
    %828 = vmatprep.subr.bf16.mxu0 %v678
    %829 = vmatpush1.bf16.msra.mxu0 %v677
    %830 = vmatprep.subr.bf16.mxu0 %v683
    %831 = vmatpush1.bf16.msra.mxu0 %v682
    %832 = vmatprep.subr.bf16.mxu0 %v688
    %833 = vmatpush1.bf16.msra.mxu0 %v687
    %834 = vmatprep.subr.bf16.mxu0 %v693
    %835 = vmatpush1.bf16.msra.mxu0 %v692
    %836 = vmatprep.subr.bf16.mxu0 %v698
    %837 = vmatpush1.bf16.msra.mxu0 %v697
    %838 = vmatprep.subr.bf16.mxu0 %v703
    %839 = vmatpush1.bf16.msra.mxu0 %v702
    %840 = vmatprep.subr.bf16.mxu0 %v708
    %841 = vmatpush1.bf16.msra.mxu0 %v707
    %842 = vmatprep.subr.bf16.mxu0 %v713
    %843 = vmatpush1.bf16.msra.mxu0 %v712
    %844 = vmatprep.subr.bf16.mxu0 %v718
    %845 = vmatpush1.bf16.msra.mxu0 %v717
    %846 = vmatprep.subr.bf16.mxu0 %v723
    %847 = vmatpush1.bf16.msra.mxu0 %v722
    %848 = vmatprep.subr.bf16.mxu0 %v728
    %849 = vmatpush1.bf16.msra.mxu0 %v727
    %850 = vmatprep.subr.bf16.mxu0 %v733
    %851 = vmatpush1.bf16.msra.mxu0 %v732
    %852 = vmatprep.subr.bf16.mxu0 %v738
    %853 = vmatpush1.bf16.msra.mxu0 %v737
    %854 = vmatprep.mubr.bf16.mxu0 %v275
    %855 = vmatmul.mubr.bf16.gmra.mrb[0].mxu0 %v247
    %v856 = vpop.f32.mrb[0].mxu0
    %v857 = vadd.f32 %v384, %v856
    %v858 = vpop.f32.mrb[0].mxu0
    %v859 = vadd.f32 %v388, %v858
    %v860 = vpop.f32.mrb[0].mxu0
    %v861 = vadd.f32 %v384, %v860
    %v862 = vpop.f32.mrb[0].mxu0
    %v863 = vadd.f32 %v388, %v862
    %864 = vmatprep.mubr.bf16.mxu0 %v276
    %865 = vmatmul.mubr.bf16.gmra.mrb[0].mxu0 %v248
    %v866 = vpop.f32.mrb[0].mxu0
    %v867 = vadd.f32 %v384, %v866
    %v868 = vpop.f32.mrb[0].mxu0
    %v869 = vadd.f32 %v388, %v868
    %v870 = vpop.f32.mrb[0].mxu0
    %v871 = vadd.f32 %v384, %v870
    %v872 = vpop.f32.mrb[0].mxu0
    %v873 = vadd.f32 %v388, %v872
    %874 = vmatprep.mubr.bf16.mxu0 %v277
    %875 = vmatmul.mubr.bf16.gmra.mrb[0].mxu0 %v249
    %v876 = vpop.f32.mrb[0].mxu0
    %v877 = vadd.f32 %v384, %v876
    %v878 = vpop.f32.mrb[0].mxu0
    %v879 = vadd.f32 %v388, %v878
    %v880 = vpop.f32.mrb[0].mxu0
    %v881 = vadd.f32 %v384, %v880
    %v882 = vpop.f32.mrb[0].mxu0
    %v883 = vadd.f32 %v388, %v882
    %884 = vmatprep.mubr.bf16.mxu0 %v278
    %885 = vmatmul.mubr.bf16.gmra.mrb[0].mxu0 %v250
    %v886 = vpop.f32.mrb[0].mxu0
    %v887 = vadd.f32 %v384, %v886
    %v888 = vpop.f32.mrb[0].mxu0
    %v889 = vadd.f32 %v388, %v888
    %v890 = vpop.f32.mrb[0].mxu0
    %v891 = vadd.f32 %v384, %v890
    %v892 = vpop.f32.mrb[0].mxu0
    %v893 = vadd.f32 %v388, %v892
    %894 = vdwg.mxu0
    %895 = vmatprep.subr.bf16.mxu0 %v665
    %896 = vmatpush1.bf16.msra.mxu0 %v664
    %897 = vmatprep.subr.bf16.mxu0 %v670
    %898 = vmatpush1.bf16.msra.mxu0 %v669
    %899 = vmatprep.subr.bf16.mxu0 %v675
    %900 = vmatpush1.bf16.msra.mxu0 %v674
    %901 = vmatprep.subr.bf16.mxu0 %v680
    %902 = vmatpush1.bf16.msra.mxu0 %v679
    %903 = vmatprep.subr.bf16.mxu0 %v685
    %904 = vmatpush1.bf16.msra.mxu0 %v684
    %905 = vmatprep.subr.bf16.mxu0 %v690
    %906 = vmatpush1.bf16.msra.mxu0 %v689
    %907 = vmatprep.subr.bf16.mxu0 %v695
    %908 = vmatpush1.bf16.msra.mxu0 %v694
    %909 = vmatprep.subr.bf16.mxu0 %v700
    %910 = vmatpush1.bf16.msra.mxu0 %v699
    %911 = vmatprep.subr.bf16.mxu0 %v705
    %912 = vmatpush1.bf16.msra.mxu0 %v704
    %913 = vmatprep.subr.bf16.mxu0 %v710
    %914 = vmatpush1.bf16.msra.mxu0 %v709
    %915 = vmatprep.subr.bf16.mxu0 %v715
    %916 = vmatpush1.bf16.msra.mxu0 %v714
    %917 = vmatprep.subr.bf16.mxu0 %v720
    %918 = vmatpush1.bf16.msra.mxu0 %v719
    %919 = vmatprep.subr.bf16.mxu0 %v725
    %920 = vmatpush1.bf16.msra.mxu0 %v724
    %921 = vmatprep.subr.bf16.mxu0 %v730
    %922 = vmatpush1.bf16.msra.mxu0 %v729
    %923 = vmatprep.subr.bf16.mxu0 %v735
    %924 = vmatpush1.bf16.msra.mxu0 %v734
    %925 = vmatprep.subr.bf16.mxu0 %v740
    %926 = vmatpush1.bf16.msra.mxu0 %v739
    %927 = vmatprep.mubr.bf16.mxu0 %v275
    %928 = vmatmul.mubr.bf16.gmra.mrb[0].mxu0 %v247
    %v929 = vpop.f32.mrb[0].mxu0
    %v930 = vadd.f32 %v392, %v929
    %v931 = vpop.f32.mrb[0].mxu0
    %v932 = vadd.f32 %v396, %v931
    %v933 = vpop.f32.mrb[0].mxu0
    %v934 = vadd.f32 %v392, %v933
    %v935 = vpop.f32.mrb[0].mxu0
    %v936 = vadd.f32 %v396, %v935
    %937 = vmatprep.mubr.bf16.mxu0 %v276
    %938 = vmatmul.mubr.bf16.gmra.mrb[0].mxu0 %v248
    %v939 = vpop.f32.mrb[0].mxu0
    %v940 = vadd.f32 %v392, %v939
    %v941 = vpop.f32.mrb[0].mxu0
    %v942 = vadd.f32 %v396, %v941
    %v943 = vpop.f32.mrb[0].mxu0
    %v944 = vadd.f32 %v392, %v943
    %v945 = vpop.f32.mrb[0].mxu0
    %v946 = vadd.f32 %v396, %v945
    %947 = vmatprep.mubr.bf16.mxu0 %v277
    %948 = vmatmul.mubr.bf16.gmra.mrb[0].mxu0 %v249
    %v949 = vpop.f32.mrb[0].mxu0
    %v950 = vadd.f32 %v392, %v949
    %v951 = vpop.f32.mrb[0].mxu0
    %v952 = vadd.f32 %v396, %v951
    %v953 = vpop.f32.mrb[0].mxu0
    %v954 = vadd.f32 %v392, %v953
    %v955 = vpop.f32.mrb[0].mxu0
    %v956 = vadd.f32 %v396, %v955
    %957 = vmatprep.mubr.bf16.mxu0 %v278
    %958 = vmatmul.mubr.bf16.gmra.mrb[0].mxu0 %v250
    %v959 = vpop.f32.mrb[0].mxu0
    %v960 = vadd.f32 %v392, %v959
    %v961 = vpop.f32.mrb[0].mxu0
    %v962 = vadd.f32 %v396, %v961
    %v963 = vpop.f32.mrb[0].mxu0
    %v964 = vadd.f32 %v392, %v963
    %v965 = vpop.f32.mrb[0].mxu0
    %v966 = vadd.f32 %v396, %v965
    %967 = vdwg.mxu0
    %968 = vmatprep.subr.bf16.mxu0 0
    %969 = vmatpush1.bf16.msra.mxu0 %v666
    %970 = vmatprep.subr.bf16.mxu0 0
    %971 = vmatpush1.bf16.msra.mxu0 %v671
    %972 = vmatprep.subr.bf16.mxu0 0
    %973 = vmatpush1.bf16.msra.mxu0 %v676
    %974 = vmatprep.subr.bf16.mxu0 0
    %975 = vmatpush1.bf16.msra.mxu0 %v681
    %976 = vmatprep.subr.bf16.mxu0 0
    %977 = vmatpush1.bf16.msra.mxu0 %v686
    %978 = vmatprep.subr.bf16.mxu0 0
    %979 = vmatpush1.bf16.msra.mxu0 %v691
    %980 = vmatprep.subr.bf16.mxu0 0
    %981 = vmatpush1.bf16.msra.mxu0 %v696
    %982 = vmatprep.subr.bf16.mxu0 0
    %983 = vmatpush1.bf16.msra.mxu0 %v701
    %984 = vmatprep.subr.bf16.mxu0 0
    %985 = vmatpush1.bf16.msra.mxu0 %v706
    %986 = vmatprep.subr.bf16.mxu0 0
    %987 = vmatpush1.bf16.msra.mxu0 %v711
    %988 = vmatprep.subr.bf16.mxu0 0
    %989 = vmatpush1.bf16.msra.mxu0 %v716
    %990 = vmatprep.subr.bf16.mxu0 0
    %991 = vmatpush1.bf16.msra.mxu0 %v721
    %992 = vmatprep.subr.bf16.mxu0 0
    %993 = vmatpush1.bf16.msra.mxu0 %v726
    %994 = vmatprep.subr.bf16.mxu0 0
    %995 = vmatpush1.bf16.msra.mxu0 %v731
    %996 = vmatprep.subr.bf16.mxu0 0
    %997 = vmatpush1.bf16.msra.mxu0 %v736
    %998 = vmatprep.subr.bf16.mxu0 0
    %999 = vmatpush1.bf16.msra.mxu0 %v741
    %1000 = vmatprep.mubr.bf16.mxu0 %v275
    %1001 = vmatmul.mubr.bf16.gmra.mrb[0].mxu0 %v247
    %v1002 = vpop.f32.mrb[0].mxu0
    %v1003 = vadd.f32 %v400, %v1002
    %v1004 = vpop.f32.mrb[0].mxu0
    %v1005 = vpop.f32.mrb[0].mxu0
    %v1006 = vadd.f32 %v400, %v1005
    %v1007 = vpop.f32.mrb[0].mxu0
    %1008 = vmatprep.mubr.bf16.mxu0 %v276
    %1009 = vmatmul.mubr.bf16.gmra.mrb[0].mxu0 %v248
    %v1010 = vpop.f32.mrb[0].mxu0
    %v1011 = vadd.f32 %v400, %v1010
    %v1012 = vpop.f32.mrb[0].mxu0
    %v1013 = vpop.f32.mrb[0].mxu0
    %v1014 = vadd.f32 %v400, %v1013
    %v1015 = vpop.f32.mrb[0].mxu0
    %1016 = vmatprep.mubr.bf16.mxu0 %v277
    %1017 = vmatmul.mubr.bf16.gmra.mrb[0].mxu0 %v249
    %v1018 = vpop.f32.mrb[0].mxu0
    %v1019 = vadd.f32 %v400, %v1018
    %v1020 = vpop.f32.mrb[0].mxu0
    %v1021 = vpop.f32.mrb[0].mxu0
    %v1022 = vadd.f32 %v400, %v1021
    %v1023 = vpop.f32.mrb[0].mxu0
    %1024 = vmatprep.mubr.bf16.mxu0 %v278
    %1025 = vmatmul.mubr.bf16.gmra.mrb[0].mxu0 %v250
    %v1026 = vpop.f32.mrb[0].mxu0
    %v1027 = vadd.f32 %v400, %v1026
    %v1028 = vpop.f32.mrb[0].mxu0
    %v1029 = vpop.f32.mrb[0].mxu0
    %v1030 = vadd.f32 %v400, %v1029
    %v1031 = vpop.f32.mrb[0].mxu0
    %1032 = vdwg.mxu0
    %v1033 = vmax.f32 %v857, 0.0
    %v1034 = vmax.f32 %v859, 0.0
    %v1035 = vmax.f32 %v930, 0.0
    %v1036 = vmax.f32 %v932, 0.0
    %v1037 = vmax.f32 %v1003, 0.0
    %v1038 = vmax.f32 %v861, 0.0
    %v1039 = vmax.f32 %v863, 0.0
    %v1040 = vmax.f32 %v934, 0.0
    %v1041 = vmax.f32 %v936, 0.0
    %v1042 = vmax.f32 %v1006, 0.0
    %v1043 = vmax.f32 %v867, 0.0
    %v1044 = vmax.f32 %v869, 0.0
    %v1045 = vmax.f32 %v940, 0.0
    %v1046 = vmax.f32 %v942, 0.0
    %v1047 = vmax.f32 %v1011, 0.0
    %v1048 = vmax.f32 %v871, 0.0
    %v1049 = vmax.f32 %v873, 0.0
    %v1050 = vmax.f32 %v944, 0.0
    %v1051 = vmax.f32 %v946, 0.0
    %v1052 = vmax.f32 %v1014, 0.0
    %v1053 = vmax.f32 %v877, 0.0
    %v1054 = vmax.f32 %v879, 0.0
    %v1055 = vmax.f32 %v950, 0.0
    %v1056 = vmax.f32 %v952, 0.0
    %v1057 = vmax.f32 %v1019, 0.0
    %v1058 = vmax.f32 %v881, 0.0
    %v1059 = vmax.f32 %v883, 0.0
    %v1060 = vmax.f32 %v954, 0.0
    %v1061 = vmax.f32 %v956, 0.0
    %v1062 = vmax.f32 %v1022, 0.0
    %v1063 = vmax.f32 %v887, 0.0
    %v1064 = vmax.f32 %v889, 0.0
    %v1065 = vmax.f32 %v960, 0.0
    %v1066 = vmax.f32 %v962, 0.0
    %v1067 = vmax.f32 %v1027, 0.0
    %v1068 = vmax.f32 %v891, 0.0
    %v1069 = vmax.f32 %v893, 0.0
    %v1070 = vmax.f32 %v964, 0.0
    %v1071 = vmax.f32 %v966, 0.0
    %v1072 = vmax.f32 %v1030, 0.0
    %v1073 = vpack.c.bf16 %v1038, %v1033
    %v1074 = vpack.c.bf16 %v1039, %v1034
    %v1075 = vpack.c.bf16 %v1040, %v1035
    %v1076 = vpack.c.bf16 %v1041, %v1036
    %v1077 = vpack.c.bf16 %v1042, %v1037
    %v1078 = vpack.c.bf16 %v1048, %v1043
    %v1079 = vpack.c.bf16 %v1049, %v1044
    %v1080 = vpack.c.bf16 %v1050, %v1045
    %v1081 = vpack.c.bf16 %v1051, %v1046
    %v1082 = vpack.c.bf16 %v1052, %v1047
    %v1083 = vpack.c.bf16 %v1058, %v1053
    %v1084 = vpack.c.bf16 %v1059, %v1054
    %v1085 = vpack.c.bf16 %v1060, %v1055
    %v1086 = vpack.c.bf16 %v1061, %v1056
    %v1087 = vpack.c.bf16 %v1062, %v1057
    %v1088 = vpack.c.bf16 %v1068, %v1063
    %v1089 = vpack.c.bf16 %v1069, %v1064
    %v1090 = vpack.c.bf16 %v1070, %v1065
    %v1091 = vpack.c.bf16 %v1071, %v1066
    %v1092 = vpack.c.bf16 %v1072, %v1067
    %v1113 = vunpack.c.l.b16 %v1073
    %v1114 = vunpack.c.l.b16 %v1074
    %v1115 = vunpack.c.l.b16 %v1075
    %v1116 = vunpack.c.l.b16 %v1076
    %v1117 = vunpack.c.l.b16 %v1077
    %v1118 = vunpack.c.h.b16 %v1073
    %v1119 = vunpack.c.h.b16 %v1074
    %v1120 = vunpack.c.h.b16 %v1075
    %v1121 = vunpack.c.h.b16 %v1076
    %v1122 = vunpack.c.h.b16 %v1077
    %v1123 = vunpack.c.l.b16 %v1078
    %v1124 = vunpack.c.l.b16 %v1079
    %v1125 = vunpack.c.l.b16 %v1080
    %v1126 = vunpack.c.l.b16 %v1081
    %v1127 = vunpack.c.l.b16 %v1082
    %v1128 = vunpack.c.h.b16 %v1078
    %v1129 = vunpack.c.h.b16 %v1079
    %v1130 = vunpack.c.h.b16 %v1080
    %v1131 = vunpack.c.h.b16 %v1081
    %v1132 = vunpack.c.h.b16 %v1082
    %v1133 = vunpack.c.l.b16 %v1083
    %v1134 = vunpack.c.l.b16 %v1084
    %v1135 = vunpack.c.l.b16 %v1085
    %v1136 = vunpack.c.l.b16 %v1086
    %v1137 = vunpack.c.l.b16 %v1087
    %v1138 = vunpack.c.h.b16 %v1083
    %v1139 = vunpack.c.h.b16 %v1084
    %v1140 = vunpack.c.h.b16 %v1085
    %v1141 = vunpack.c.h.b16 %v1086
    %v1142 = vunpack.c.h.b16 %v1087
    %v1143 = vunpack.c.l.b16 %v1088
    %v1144 = vunpack.c.l.b16 %v1089
    %v1145 = vunpack.c.l.b16 %v1090
    %v1146 = vunpack.c.l.b16 %v1091
    %v1147 = vunpack.c.l.b16 %v1092
    %v1148 = vunpack.c.h.b16 %v1088
    %v1149 = vunpack.c.h.b16 %v1089
    %v1150 = vunpack.c.h.b16 %v1090
    %v1151 = vunpack.c.h.b16 %v1091
    %v1152 = vunpack.c.h.b16 %v1092
    %v1153 = vpack.c.b16 %v1114, %v1113
    %v1154 = vpack.c.b16 %v1116, %v1115
    %v1155 = vpack.c.b16 %v1117, %v1117
    %v1156 = vpack.c.b16 %v1119, %v1118
    %v1157 = vpack.c.b16 %v1121, %v1120
    %v1158 = vpack.c.b16 %v1122, %v1122
    %v1159 = vpack.c.b16 %v1124, %v1123
    %v1160 = vpack.c.b16 %v1126, %v1125
    %v1161 = vpack.c.b16 %v1127, %v1127
    %v1162 = vpack.c.b16 %v1129, %v1128
    %v1163 = vpack.c.b16 %v1131, %v1130
    %v1164 = vpack.c.b16 %v1132, %v1132
    %v1165 = vpack.c.b16 %v1134, %v1133
    %v1166 = vpack.c.b16 %v1136, %v1135
    %v1167 = vpack.c.b16 %v1137, %v1137
    %v1168 = vpack.c.b16 %v1139, %v1138
    %v1169 = vpack.c.b16 %v1141, %v1140
    %v1170 = vpack.c.b16 %v1142, %v1142
    %v1171 = vpack.c.b16 %v1144, %v1143
    %v1172 = vpack.c.b16 %v1146, %v1145
    %v1173 = vpack.c.b16 %v1147, %v1147
    %v1174 = vpack.c.b16 %v1149, %v1148
    %v1175 = vpack.c.b16 %v1151, %v1150
    %v1176 = vpack.c.b16 %v1152, %v1152
    %1201 = vst [vmem:[#allocation7] sm:$0xff] %v1153
    %1202 = vst [vmem:[#allocation7 + $0x8] sm:$0xff] %v1154
    %1203 = vst [vmem:[#allocation7 + $0x10] sm:$0xf] %v1155
    %1204 = vst [vmem:[#allocation7 + $0x14] sm:$0xff] %v1156
    %1205 = vst [vmem:[#allocation7 + $0x1c] sm:$0xff] %v1157
    %1206 = vst [vmem:[#allocation7 + $0x24] sm:$0xf] %v1158
    %1207 = vst [vmem:[#allocation7 + $0x28] sm:$0xff] %v1159
    %1208 = vst [vmem:[#allocation7 + $0x30] sm:$0xff] %v1160
    %1209 = vst [vmem:[#allocation7 + $0x38] sm:$0xf] %v1161
    %1210 = vst [vmem:[#allocation7 + $0x3c] sm:$0xff] %v1162
    %1211 = vst [vmem:[#allocation7 + $0x44] sm:$0xff] %v1163
    %1212 = vst [vmem:[#allocation7 + $0x4c] sm:$0xf] %v1164
    %1213 = vst [vmem:[#allocation7 + $0x50] sm:$0xff] %v1165
    %1214 = vst [vmem:[#allocation7 + $0x58] sm:$0xff] %v1166
    %1215 = vst [vmem:[#allocation7 + $0x60] sm:$0xf] %v1167
    %1216 = vst [vmem:[#allocation7 + $0x64] sm:$0xff] %v1168
    %1217 = vst [vmem:[#allocation7 + $0x6c] sm:$0xff] %v1169
    %1218 = vst [vmem:[#allocation7 + $0x74] sm:$0xf] %v1170
    %1219 = vst [vmem:[#allocation7 + $0x78] sm:$0xff] %v1171
    %1220 = vst [vmem:[#allocation7 + $0x80] sm:$0xff] %v1172
    %1221 = vst [vmem:[#allocation7 + $0x88] sm:$0xf] %v1173
    %1222 = vst [vmem:[#allocation7 + $0x8c] sm:$0xff] %v1174
    %1223 = vst [vmem:[#allocation7 + $0x94] sm:$0xff] %v1175
    %1224 = vst [vmem:[#allocation7 + $0x9c] sm:$0xf] %v1176
    // Predicated region
    $region34: #{tpu_custom_call.1} parent=1 // pred_check
      _
    $region35: #{tpu_custom_call.1} parent=1 // pred_check_branch
      %1226 = sbr.rel (0) target = $region37
    $region36: #{tpu_custom_call.1} parent=1 // pred_region
      %s1228 = ssub.s32 2560, 2560
      %1229 = vsyncadd [#allocation4], %s1228
      %s1230 = sshll.u32 [#allocation7], 4
      %s1231 = int_to_ptr.vmem [resolvable:$true] %s1230
      %1236 = dma.vmem_to_hbm [thread:$0]  %s1231, 2560, %s6, [#allocation4], 320, 320, 20
    $region37: #{tpu_custom_call.1} parent=1 // pred_fallthru
      _
    // Predicated region
    $region38: #{tpu_custom_call.1} parent=1 // pred_check
      _
    $region39: #{tpu_custom_call.1} parent=1 // pred_check_branch
      %1238 = sbr.rel (0) target = $region41
    $region40: #{tpu_custom_call.1} parent=1 // pred_region
      %1239 = dma.done [#allocation4], 2560
    $region41: #{tpu_custom_call.1} parent=1 // pred_fallthru
      _
    %1240 = vsyncpa [#allocation3], 1
    %1241 = vsyncpa [#allocation6], 1
    %1242 = vsyncpa [#allocation4], 1

</llo_original>
